<compile_context>
chip_gen: v7x
topology: tpu7x:2x2x1
jax: 0.10.0
libtpu: 0.0.40
codegen_flags: <defaults>
</compile_context>

<pallas_src>
import functools
import numpy as np
import jax
import jax.numpy as jnp
from jax.experimental import pallas as pl
from jax.experimental.pallas import tpu as pltpu

NEG_SLOPE = 0.2          # GATConv LeakyReLU negative_slope
BN_EPS = 1e-5
MASK_BIAS = -1e30        # additive mask for non-edges (exp underflows to exactly 0)


def _round_up(n, m):
    return ((n + m - 1) // m) * m


def _choose_tiling(n, target):
    """Row tile (multiple of 16 for bf16 sublane packing) and padded node count."""
    tm = min(int(target), _round_up(n, 16))
    tm = max(16, (tm // 16) * 16)
    return tm, _round_up(n, tm)


def _tpu_config():
    """Per-generation (row_tile_target, vmem_limit_bytes, score_dtype).

    v5e/v6e: 128 MiB VMEM/TC -> TM=512, ~96 MiB scoped limit.
    v7x (64 MiB/TC) or unknown: TM=256, 48 MiB limit.
    bf16 score pipeline only where the VPU/EUP support bf16 (v6e/v7x); f32 on v5e.
    """
    vmem, name = 0, ""
    try:
        info = pltpu.get_tpu_info()
        vmem = int(getattr(info, "vmem_capacity_bytes", 0) or 0)
        for attr in ("chip_version", "version", "chip_name", "name"):
            v = getattr(info, attr, None)
            if v is not None:
                name = str(v).lower()
                break
    except Exception:
        pass
    if vmem >= 100 * 1024 * 1024:
        row_tile, vmem_limit = 512, 96 * 1024 * 1024
    else:
        row_tile, vmem_limit = 256, 48 * 1024 * 1024
    score_dtype = jnp.float32 if "v5" in name else jnp.bfloat16
    return row_tile, vmem_limit, score_dtype


# ---------------------------------------------------------------------------
# Pass 1: fused projection.  ONE MXU matmul (bf16 operands, f32 accumulate):
#   acc = x @ [W | W@att_dst | W@att_src]        [TM, D + 2H]
#   xp    = acc[:, :D]   (bf16, values for aggregation)
#   alpha = acc[:, D:]   (f32, per-head attention logit pieces: [dst | src])
# ---------------------------------------------------------------------------
def gat_project_kernel(x_ref, w_ref, xp_ref, alpha_ref, *, d_model):
    acc = jnp.dot(x_ref[...], w_ref[...], preferred_element_type=jnp.float32)
    xp_ref[...] = acc[:, :d_model].astype(jnp.bfloat16)
    alpha_ref[...] = acc[:, d_model:]


# ---------------------------------------------------------------------------
# Pass 2: masked attention softmax + aggregation + fused (bias / BN-eval / ELU).
#   bias   : [TM, Np]        bf16  additive mask (0 on edges incl. self loops, -1e30 else)
#   a_dst  : [TM, H]         f32   destination attention terms for this row tile
#   a_srcT : [H, Np]         f32   source attention terms (all nodes), transposed
#   xp_aug : [Np, H*(C+1)]   bf16  per head: [projected features | ones column]
#   scale  : [1, D]          f32   gamma / sqrt(var + eps)
#   shift  : [1, D]          f32   gat_bias*scale + beta - mean*scale
#   out    : [TM, D]         bf16  ELU(BN(GAT(x)))  (heads concatenated)
# ---------------------------------------------------------------------------
def gat_attention_kernel(bias_ref, adst_ref, asrcT_ref, xpa_ref, scale_ref, shift_ref,
                         out_ref, *, heads, out_per_head, score_dtype):
    bias = bias_ref[...].astype(score_dtype)           # additive mask, no compare/select
    a_dst = adst_ref[...].astype(score_dtype)          # [TM, H]
    a_srcT = asrcT_ref[...].astype(score_dtype)        # [H, Np]
    xpa = xpa_ref[...]                                  # [Np, H*(C+1)] bf16
    scale = scale_ref[...]                               # [1, D] f32
    shift = shift_ref[...]                               # [1, D] f32

    C = out_per_head
    Ca = C + 1
    ys = []
    for h in range(heads):                               # static unroll (H = 4)
        # e[i, j] = LeakyReLU(a_dst[i,h] + a_src[j,h]) + mask_bias[i,j]
        e = a_dst[:, h:h + 1] + a_srcT[h:h + 1, :]                        # [TM, Np]
        e = jnp.maximum(e, NEG_SLOPE * e)                # LeakyReLU (slope < 1 -> max form)
        e = e + bias
        m = jnp.max(e, axis=1, keepdims=True)
        # Self loops guarantee every real row's max is a real edge, so masked
        # entries underflow to exactly 0 after exp (no re-mask needed).
        p = jnp.exp(e - m)
        # One MXU matmul yields both the (un-normalized) aggregation and, via
        # the ones column of xp_aug, the f32-accumulated softmax denominator.
        aggd = jnp.dot(p.astype(jnp.bfloat16), xpa[:, h * Ca:(h + 1) * Ca],
                       preferred_element_type=jnp.float32)                # [TM, C+1]
        inv = pl.reciprocal(aggd[:, C:C + 1], approx=True)                # [TM, 1]
        c0 = h * C
        y = aggd[:, :C] * (inv * scale[0:1, c0:c0 + C]) + shift[0:1, c0:c0 + C]
        # ELU(alpha=1), clamp before exp so the discarded branch never overflows.
        y = jnp.where(y > 0.0, y, jnp.exp(jnp.minimum(y, 0.0)) - 1.0)
        ys.append(y)

    out_ref[...] = jnp.concatenate(ys, axis=-1).astype(out_ref.dtype)      # one lane-dense store


def _augment_weight(W, att_src, att_dst, heads, C):
    """[W | W@att_dst | W@att_src]  ->  [F_in, D + 2H] bf16 (pass-1 fused weight)."""
    F_in = W.shape[0]
    W3 = W.reshape(F_in, heads, C)
    wa_dst = jnp.einsum("fhc,hc->fh", W3, att_dst)      # [F_in, H]
    wa_src = jnp.einsum("fhc,hc->fh", W3, att_src)      # [F_in, H]
    return jnp.concatenate([W, wa_dst, wa_src], axis=1).astype(jnp.bfloat16)


def gat_layer(x, W_aug, scale, shift, adj_bias, heads, out_per_head, *,
              row_tile, vmem_limit, score_dtype):
    """One DiverseGATConv layer + fused (GAT bias, eval BatchNorm, ELU).

    x        : [Np, F_in]   bf16 (row-padded)
    W_aug    : [F_in, D+2H] bf16
    adj_bias : [Np, Np]     bf16 additive mask
    returns  : [Np, D]      bf16
    """
    Np, F_in = x.shape
    D = heads * out_per_head
    TM = row_tile
    nb = Np // TM
    cp = pltpu.CompilerParams(dimension_semantics=("parallel",),
                              vmem_limit_bytes=vmem_limit)

    # --- pass 1: fused projection + attention logit pieces (row-tiled) -------
    xp, alpha = pl.pallas_call(
        functools.partial(gat_project_kernel, d_model=D),
        grid=(nb,),
        in_specs=[pl.BlockSpec((TM, F_in), lambda i: (i, 0)),
                  pl.BlockSpec((F_in, D + 2 * heads), lambda i: (0, 0))],
        out_specs=[pl.BlockSpec((TM, D), lambda i: (i, 0)),
                   pl.BlockSpec((TM, 2 * heads), lambda i: (i, 0))],
        out_shape=(jax.ShapeDtypeStruct((Np, D), jnp.bfloat16),
                   jax.ShapeDtypeStruct((Np, 2 * heads), jnp.float32)),
        compiler_params=cp,
    )(x, W_aug)

    a_dst = alpha[:, :heads]            # [Np, H]
    a_srcT = alpha[:, heads:].T         # [H, Np]   (tiny layout glue)
    # Append a ones column per head so pass 2 gets the softmax denominator from
    # the same MXU matmul as the aggregation (no cross-lane sum per head).
    Ca = out_per_head + 1
    xp_aug = jnp.concatenate(
        [xp.reshape(Np, heads, out_per_head),
         jnp.ones((Np, heads, 1), jnp.bfloat16)], axis=-1).reshape(Np, heads * Ca)

    # --- pass 2: masked softmax + aggregation + fused epilogue (row-tiled) ---
    kernel = functools.partial(gat_attention_kernel, heads=heads,
                               out_per_head=out_per_head, score_dtype=score_dtype)
    out = pl.pallas_call(
        kernel,
        grid=(nb,),
        in_specs=[pl.BlockSpec((TM, Np), lambda i: (i, 0)),            # additive mask tile
                  pl.BlockSpec((TM, heads), lambda i: (i, 0)),         # alpha_dst tile
                  pl.BlockSpec((heads, Np), lambda i: (0, 0)),         # alpha_src^T (full)
                  pl.BlockSpec((Np, heads * Ca), lambda i: (0, 0)),    # xp_aug (full, bf16)
                  pl.BlockSpec((1, D), lambda i: (0, 0)),              # scale
                  pl.BlockSpec((1, D), lambda i: (0, 0))],             # shift
        out_specs=pl.BlockSpec((TM, D), lambda i: (i, 0)),
        out_shape=jax.ShapeDtypeStruct((Np, D), jnp.bfloat16),
        compiler_params=cp,
    )(adj_bias, a_dst, a_srcT, xp_aug, scale.reshape(1, -1), shift.reshape(1, -1))
    return out


# ---------------------------------------------------------------------------
# Diversity loss (orthogonal_reg=True branch).  Parameters-only -> plain jnp,
# hoisted out of the feature loop (launch-overhead dominated otherwise).
#   loss = diversity_weight * ||P P^T * (1 - I)||_F / (H*(H-1)/2)
# ---------------------------------------------------------------------------
def diversity_loss(head_proj, diversity_weight):
    H = head_proj.shape[0]
    P = head_proj.reshape(H, -1).astype(jnp.float32)
    gram = P @ P.T
    gram = gram * (1.0 - jnp.eye(H, dtype=jnp.float32))
    num_pairs = max(1, H * (H - 1) // 2)
    return diversity_weight * jnp.sqrt(jnp.sum(gram * gram)) / num_pairs


# ---------------------------------------------------------------------------
# Parameter init (deterministic, synthetic) and full-model forward.
# ---------------------------------------------------------------------------
def init_params(key, input_dim, hidden_dim, output_dim, num_layers, heads):
    params = {"layers": []}
    in_dim = input_dim
    D = hidden_dim * heads
    for _ in range(num_layers):
        key, k1, k2, k3, k4 = jax.random.split(key, 5)
        W = jax.random.normal(k1, (in_dim, D), jnp.float32) / np.sqrt(in_dim)
        att_src = jax.random.normal(k2, (heads, hidden_dim), jnp.float32) * 0.1
        att_dst = jax.random.normal(k3, (heads, hidden_dim), jnp.float32) * 0.1
        # orthogonal head projectors [H, C, C] (nn.init.orthogonal_ analogue via QR)
        hp = jax.random.normal(k4, (heads, hidden_dim, hidden_dim), jnp.float32)
        q, r = jnp.linalg.qr(hp)
        d = jnp.sign(jnp.diagonal(r, axis1=-2, axis2=-1))
        head_proj = q * d[:, None, :]
        params["layers"].append(dict(
            W=W, att_src=att_src, att_dst=att_dst,
            gat_bias=jnp.zeros((D,), jnp.float32),           # GATConv bias (zeros init)
            bn_gamma=jnp.ones((D,), jnp.float32),            # BatchNorm1d defaults
            bn_beta=jnp.zeros((D,), jnp.float32),
            bn_mean=jnp.zeros((D,), jnp.float32),
            bn_var=jnp.ones((D,), jnp.float32),
            head_proj=head_proj,
        ))
        in_dim = D
    key, k5, k6 = jax.random.split(key, 3)
    params["W_out"] = jax.random.normal(k5, (in_dim, output_dim), jnp.float32) / np.sqrt(in_dim)
    params["b_out"] = jax.random.normal(k6, (output_dim,), jnp.float32) * 0.01
    return params


def diverse_gat_forward(params, x, adj, pool_mat, heads, hidden_dim,
                        diversity_weight=0.1, row_tile=None,
                        return_node_features=False):
    """Eval-mode forward.  `adj[i, j] = 1` iff edge j -> i (self loops required)."""
    N = x.shape[0]
    target, vmem_limit, score_dtype = _tpu_config()
    if row_tile is not None:
        target = row_tile
    TM, Np = _choose_tiling(N, target)

    # Pad to a tile multiple; padded rows/cols are fully masked by the additive
    # bias (never an O(N^2) fallback tile).  Mask bias precomputed once (bf16),
    # so the kernel does one add instead of cast + compare + select per tile.
    pad = Np - N
    adj_p = jnp.pad(adj, ((0, pad), (0, pad)))
    adj_bias = jnp.where(adj_p > 0, 0.0, MASK_BIAS).astype(jnp.bfloat16)
    h = jnp.pad(x, ((0, pad), (0, 0))).astype(jnp.bfloat16)

    for lp in params["layers"]:
        scale = lp["bn_gamma"] / jnp.sqrt(lp["bn_var"] + BN_EPS)
        shift = lp["gat_bias"] * scale + lp["bn_beta"] - lp["bn_mean"] * scale
        W_aug = _augment_weight(lp["W"], lp["att_src"], lp["att_dst"], heads, hidden_dim)
        h = gat_layer(h, W_aug, scale, shift, adj_bias, heads, hidden_dim,
                      row_tile=TM, vmem_limit=vmem_limit, score_dtype=score_dtype)

    # Diversity loss depends only on parameters -> hoisted out of the layer loop.
    total_div = sum(diversity_loss(lp["head_proj"], diversity_weight)
                    for lp in params["layers"])

    # global_mean_pool + output Linear in plain jnp (far below MXU granularity).
    feats = h[:N].astype(jnp.float32)
    pooled = pool_mat @ feats                              # [G, D]
    logits = pooled @ params["W_out"] + params["b_out"]    # [G, O]
    if return_node_features:
        return logits, total_div, feats
    return logits, total_div


# ---------------------------------------------------------------------------
# Pure-jnp (f32) reference of the same eval-mode forward, for a sanity check.
# ---------------------------------------------------------------------------
def _reference_forward(params, x, adj, pool_mat, heads, C, diversity_weight):
    h = x
    for lp in params["layers"]:
        xp = h @ lp["W"]
        outs = []
        for hh in range(heads):
            c0 = hh * C
            xph = xp[:, c0:c0 + C]
            a_dst = xph @ lp["att_dst"][hh]
            a_src = xph @ lp["att_src"][hh]
            e = a_dst[:, None] + a_src[None, :]
            e = jnp.where(e >= 0, e, NEG_SLOPE * e)
            e = jnp.where(adj > 0, e, -jnp.inf)
            w = jax.nn.softmax(e, axis=1)
            outs.append(w @ xph)
        agg = jnp.concatenate(outs, axis=-1) + lp["gat_bias"]
        scale = lp["bn_gamma"] / jnp.sqrt(lp["bn_var"] + BN_EPS)
        y = (agg - lp["bn_mean"]) * scale + lp["bn_beta"]
        h = jnp.where(y > 0, y, jnp.exp(jnp.minimum(y, 0.0)) - 1.0)
    logits = (pool_mat @ h) @ params["W_out"] + params["b_out"]
    div = sum(diversity_loss(lp["head_proj"], diversity_weight) for lp in params["layers"])
    return logits, div, h


if __name__ == "__main__":
    N, input_dim, hidden_dim, output_dim = 128, 32, 8, 4
    heads, num_layers, num_graphs = 4, 2, 2

    key = jax.random.PRNGKey(0)
    key, kx, ke = jax.random.split(key, 3)

    # node features
    x = jax.random.normal(kx, (N, input_dim), jnp.float32)

    # deterministic random graph -> edge_index [2, E] (unique edges, no self loops)
    conn = np.array(jax.random.bernoulli(ke, 0.1, (N, N)), dtype=np.float32)
    np.fill_diagonal(conn, 0.0)
    dst_np, src_np = np.nonzero(conn)
    edge_index = np.stack([src_np, dst_np], axis=0).astype(np.int32)   # PyG [2, E]

    # dense adjacency mask with self loops (GATConv add_self_loops=True) --
    # every row having a self loop is what makes the no-re-mask softmax safe.
    adj_np = np.zeros((N, N), np.float32)
    adj_np[edge_index[1], edge_index[0]] = 1.0
    np.fill_diagonal(adj_np, 1.0)
    adj = jnp.asarray(adj_np)

    # batch assignment [N] and the corresponding mean-pool matrix [G, N]
    batch = np.repeat(np.arange(num_graphs), N // num_graphs)
    pool = np.zeros((num_graphs, N), np.float32)
    for g in range(num_graphs):
        idx = np.nonzero(batch == g)[0]
        pool[g, idx] = 1.0 / len(idx)
    pool = jnp.asarray(pool)

    params = init_params(key, input_dim, hidden_dim, output_dim, num_layers, heads)

    # row_tile=64 exercises the destination-row grid (grid=(2,)) at this small N.
    logits, div_loss, feats = diverse_gat_forward(
        params, x, adj, pool, heads, hidden_dim,
        diversity_weight=0.1, row_tile=64, return_node_features=True)
    jax.block_until_ready((logits, div_loss, feats))

    assert logits.shape == (num_graphs, output_dim)
    assert div_loss.shape == ()
    assert feats.shape == (N, hidden_dim * heads)

    # loose sanity check vs the f32 jnp reference (bf16 MXU operands, bf16 score
    # pipeline, approx reciprocal and bf16 layer outputs introduce small diffs).
    logits_ref, div_ref, feats_ref = _reference_forward(
        params, x, adj, pool, heads, hidden_dim, 0.1)
    feat_err = float(jnp.max(jnp.abs(feats - feats_ref)))
    logit_err = float(jnp.max(jnp.abs(logits - logits_ref)))
    div_err = float(jnp.abs(div_loss - div_ref))
    assert feat_err < 0.3, f"node features mismatch: max|diff|={feat_err}"
    assert logit_err < 0.12, f"logits mismatch: max|diff|={logit_err}"
    assert div_err < 1e-4, f"diversity loss mismatch: |diff|={div_err}"

    print("KERNEL_OK")
</pallas_src>

<mosaic_0001>
module attributes {stable_mosaic.version = 11 : i64} {
  func.func @gat_project_kernel(%arg0: i32, %arg1: memref<64x32xbf16, #tpu.memory_space<vmem>>, %arg2: memref<32x40xbf16, #tpu.memory_space<vmem>>, %arg3: memref<64x32xbf16, #tpu.memory_space<vmem>>, %arg4: memref<64x8xf32, #tpu.memory_space<vmem>>) attributes {dimension_semantics = [#tpu.dimension_semantics<parallel>], iteration_bounds = array<i64: 2>, scalar_prefetch = 0 : i64, scratch_operands = 0 : i64, tpu.core_type = #tpu.core_type<tc>, window_params = [{transform_indices = @transform_0, window_bounds = array<i64: 64, 32>}, {pipeline_mode = #tpu.pipeline_mode<synchronous>, transform_indices = @transform_1, window_bounds = array<i64: 32, 40>}, {transform_indices = @transform_2, window_bounds = array<i64: 64, 32>}, {transform_indices = @transform_3, window_bounds = array<i64: 64, 8>}]} {
    %c0 = arith.constant 0 : index
    %c0_0 = arith.constant 0 : index
    %0 = vector.load %arg1[%c0, %c0_0] : memref<64x32xbf16, #tpu.memory_space<vmem>>, vector<64x32xbf16>
    %c0_1 = arith.constant 0 : index
    %c0_2 = arith.constant 0 : index
    %1 = vector.load %arg2[%c0_1, %c0_2] : memref<32x40xbf16, #tpu.memory_space<vmem>>, vector<32x40xbf16>
    %cst = arith.constant dense<0.000000e+00> : vector<64x40xf32>
    %2 = tpu.matmul %0, %1, %cst {dimension_numbers = #tpu.dot_dimension_numbers<[1], [0], [0], [1], [0, 0, 1, 1], [], []>} : vector<64x32xbf16>, vector<32x40xbf16>, vector<64x40xf32> -> vector<64x40xf32>
    %3 = vector.extract_strided_slice %2 {offsets = [0, 0], sizes = [64, 32], strides = [1, 1]} : vector<64x40xf32> to vector<64x32xf32>
    %4 = arith.truncf %3 : vector<64x32xf32> to vector<64x32xbf16>
    %c0_3 = arith.constant 0 : index
    %c0_4 = arith.constant 0 : index
    %5 = vector.load %arg3[%c0_3, %c0_4] : memref<64x32xbf16, #tpu.memory_space<vmem>>, vector<64x32xbf16>
    tpu.vector_store %arg3[%c0_3, %c0_4], %4 {strides = array<i32>} : memref<64x32xbf16, #tpu.memory_space<vmem>>, vector<64x32xbf16>,
    %6 = vector.extract_strided_slice %2 {offsets = [0, 32], sizes = [64, 8], strides = [1, 1]} : vector<64x40xf32> to vector<64x8xf32>
    %c0_5 = arith.constant 0 : index
    %c0_6 = arith.constant 0 : index
    %7 = vector.load %arg4[%c0_5, %c0_6] : memref<64x8xf32, #tpu.memory_space<vmem>>, vector<64x8xf32>
    tpu.vector_store %arg4[%c0_5, %c0_6], %6 {strides = array<i32>} : memref<64x8xf32, #tpu.memory_space<vmem>>, vector<64x8xf32>,
    return
  }
  func.func @transform_0(%arg0: i32) -> (i32, i32) {
    %c0_i32 = arith.constant 0 : i32
    %c0_i32_0 = arith.constant 0 : i32
    return %arg0, %c0_i32 : i32, i32
  }
  func.func @transform_1(%arg0: i32) -> (i32, i32) {
    %c0_i32 = arith.constant 0 : i32
    %c0_i32_0 = arith.constant 0 : i32
    %c0_i32_1 = arith.constant 0 : i32
    return %c0_i32, %c0_i32_0 : i32, i32
  }
  func.func @transform_2(%arg0: i32) -> (i32, i32) {
    %c0_i32 = arith.constant 0 : i32
    %c0_i32_0 = arith.constant 0 : i32
    return %arg0, %c0_i32 : i32, i32
  }
  func.func @transform_3(%arg0: i32) -> (i32, i32) {
    %c0_i32 = arith.constant 0 : i32
    %c0_i32_0 = arith.constant 0 : i32
    return %arg0, %c0_i32 : i32, i32
  }
}

</mosaic_0001>

<llo_original>
// kernel: tpu_custom_call.1
$region0: #{tpu_custom_call.1}
  #allocation0 [shape = 'u32[]', space=smem, size = 0x4, offset = 0x4, fixed_abs, tag = 'smem constant byte address 0x4 - core index']
  #allocation1 [shape = 'u32[144,128]{1,0:T(1,128)}', space=vmem, size = 0x12000, scoped, tag = 'internal scratch']
  %s0 = inlined_call_operand.vmem [shape: bf16[128,32], index: 0, kind: input, shape index: {}]
  %s1 = inlined_call_operand.vmem [shape: bf16[32,40], index: 1, kind: input, shape index: {}]
  %s2 = inlined_call_operand.vmem [shape: bf16[128,32], index: 2, kind: output, shape index: {0}]
  %s3 = inlined_call_operand.vmem [shape: f32[128,8], index: 3, kind: output, shape index: {1}]
  %4 = xla_tuple %s2, %s3
  %s5 = sld [smem:[#allocation0]]
  $region49: #{tpu_custom_call.1} parent=0
    _
  %s7 = ssub.s32 1, %s5
  %s8 = scalar_select 0, %s7, %s5
  loop: start=0, step=1, limit=4
  $region2: #{tpu_custom_call.1} parent=0 // loop_pre_header
    _
  $region3: #{tpu_custom_call.1} parent=0 // loop_header
    %s10 = sphi 0, %s14
    %p11 = scmp.ge.s32.totalorder %s10, 4
    %s20 = sphi 0, %s22
    %s23 = sphi 0, %s20
    %s24 = sphi 0, %s23
    %s40 = sphi 0, %s24
    %s44 = sphi 0, %s44
    %s46 = sphi 0, %s44
    %s47 = sphi 0, %s46
    %s61 = sphi 0, %s47
    %s67 = sphi 0, %s69
    %s70 = sphi 0, %s67
    %s71 = sphi 0, %s70
    %s87 = sphi 0, %s71
    %s93 = sphi 0, %s95
    %s96 = sphi 0, %s93
    %s97 = sphi 0, %s96
    %s113 = sphi 0, %s97
  $region4: #{tpu_custom_call.1} parent=0 // loop_header_branch
    %13 = sbr.rel (%p11) target = $region8
  $region5: #{tpu_custom_call.1} parent=0 // loop_body
    %s15 = ssub.s32 %s10, 1
    %s16 = ssub.s32 %s10, 2
    %s17 = sadd.s32 %s10, 1
    %s18 = ssub.s32 %s10, %s17
    %p19 = scmp.eq.s32.totalorder %s18, 0
    %s21 = sadd.s32 %s20, 1
    %s22 = scalar_select %p19, %s20, %s21
    %p25 = pneg %p19
    %p26 = scmp.eq.s32.totalorder %s10, 1
    %p27 = por %p25, %p26
    %p28 = scmp.ne.s32.totalorder %s20, %s23
    %p29 = scmp.eq.s32.totalorder %s10, 0
    %p30 = por %p28, %p29
    %p31 = scmp.ne.s32.totalorder %s20, %s23
    %p32 = scmp.eq.s32.totalorder %s15, 1
    %p33 = por %p31, %p32
    %p34 = scmp.ne.s32.totalorder %s23, %s24
    %p35 = scmp.eq.s32.totalorder %s15, 0
    %p36 = por %p34, %p35
    %p37 = scmp.ne.s32.totalorder %s23, %s24
    %p38 = scmp.eq.s32.totalorder %s16, 1
    %p39 = por %p37, %p38
    %p41 = scmp.ne.s32.totalorder %s24, %s40
    %p42 = scmp.eq.s32.totalorder %s16, 0
    %p43 = por %p41, %p42
    %s45 = sadd.s32 %s44, 1
    %p48 = scmp.eq.s32.totalorder %s10, 1
    %p49 = scmp.ne.s32.totalorder %s44, %s46
    %p50 = scmp.eq.s32.totalorder %s10, 0
    %p51 = por %p49, %p50
    %p52 = scmp.ne.s32.totalorder %s44, %s46
    %p53 = scmp.eq.s32.totalorder %s15, 1
    %p54 = por %p52, %p53
    %p55 = scmp.ne.s32.totalorder %s46, %s47
    %p56 = scmp.eq.s32.totalorder %s15, 0
    %p57 = por %p55, %p56
    %p58 = scmp.ne.s32.totalorder %s46, %s47
    %p59 = scmp.eq.s32.totalorder %s16, 1
    %p60 = por %p58, %p59
    %p62 = scmp.ne.s32.totalorder %s47, %s61
    %p63 = scmp.eq.s32.totalorder %s16, 0
    %p64 = por %p62, %p63
    %s65 = ssub.s32 %s10, %s17
    %p66 = scmp.eq.s32.totalorder %s65, 0
    %s68 = sadd.s32 %s67, 1
    %s69 = scalar_select %p66, %s67, %s68
    %p72 = pneg %p66
    %p73 = scmp.eq.s32.totalorder %s10, 1
    %p74 = por %p72, %p73
    %p75 = scmp.ne.s32.totalorder %s67, %s70
    %p76 = scmp.eq.s32.totalorder %s10, 0
    %p77 = por %p75, %p76
    %p78 = scmp.ne.s32.totalorder %s67, %s70
    %p79 = scmp.eq.s32.totalorder %s15, 1
    %p80 = por %p78, %p79
    %p81 = scmp.ne.s32.totalorder %s70, %s71
    %p82 = scmp.eq.s32.totalorder %s15, 0
    %p83 = por %p81, %p82
    %p84 = scmp.ne.s32.totalorder %s70, %s71
    %p85 = scmp.eq.s32.totalorder %s16, 1
    %p86 = por %p84, %p85
    %p88 = scmp.ne.s32.totalorder %s71, %s87
    %p89 = scmp.eq.s32.totalorder %s16, 0
    %p90 = por %p88, %p89
    %s91 = ssub.s32 %s10, %s17
    %p92 = scmp.eq.s32.totalorder %s91, 0
    %s94 = sadd.s32 %s93, 1
    %s95 = scalar_select %p92, %s93, %s94
    %p98 = pneg %p92
    %p99 = scmp.eq.s32.totalorder %s10, 1
    %p100 = por %p98, %p99
    %p101 = scmp.ne.s32.totalorder %s93, %s96
    %p102 = scmp.eq.s32.totalorder %s10, 0
    %p103 = por %p101, %p102
    %p104 = scmp.ne.s32.totalorder %s93, %s96
    %p105 = scmp.eq.s32.totalorder %s15, 1
    %p106 = por %p104, %p105
    %p107 = scmp.ne.s32.totalorder %s96, %s97
    %p108 = scmp.eq.s32.totalorder %s15, 0
    %p109 = por %p107, %p108
    %p110 = scmp.ne.s32.totalorder %s96, %s97
    %p111 = scmp.eq.s32.totalorder %s16, 1
    %p112 = por %p110, %p111
    %p114 = scmp.ne.s32.totalorder %s97, %s113
    %p115 = scmp.eq.s32.totalorder %s16, 0
    %p116 = por %p114, %p115
    %p117 = scmp.le.s32.totalorder 1, %s10
    %p118 = scmp.lt.s32.totalorder %s10, 3
    %p119 = pnand %p117, %p118
    %p120 = pneg %p119
    // Predicated region
    $region9: #{tpu_custom_call.1} parent=5 // pred_check
      _
    $region10: #{tpu_custom_call.1} parent=5 // pred_check_branch
      %122 = sbr.rel (%p119) target = $region12
    $region11: #{tpu_custom_call.1} parent=5 // pred_region
      %s123 = ssub.s32 %s10, 1
      // Predicated region
      $region13: #{tpu_custom_call.1} parent=11 // pred_check
        %p124 = pneg %p57
      $region14: #{tpu_custom_call.1} parent=11 // pred_check_branch
        %126 = sbr.rel (%p124) target = $region16
      $region15: #{tpu_custom_call.1} parent=11 // pred_region
        _
      $region16: #{tpu_custom_call.1} parent=11 // pred_fallthru
        _
    $region12: #{tpu_custom_call.1} parent=5 // pred_fallthru
      _
    %p127 = scmp.lt.s32.totalorder %s10, 2
    // Predicated region
    $region17: #{tpu_custom_call.1} parent=5 // pred_check
      %p128 = pneg %p127
    $region18: #{tpu_custom_call.1} parent=5 // pred_check_branch
      %130 = sbr.rel (%p128) target = $region20
    $region19: #{tpu_custom_call.1} parent=5 // pred_region
      // Predicated region
      $region21: #{tpu_custom_call.1} parent=19 // pred_check
        %p131 = pneg %p30
      $region22: #{tpu_custom_call.1} parent=19 // pred_check_branch
        %133 = sbr.rel (%p131) target = $region24
      $region23: #{tpu_custom_call.1} parent=19 // pred_region
        %s134 = smul.u32 8, %s10
        %p135 = scmp.lt.s32.totalorder %s134, 15
        %s136 = scalar_select %p135, %s134, 15
        %s137 = smul.addr %s136, 4
        %s138 = scalar_lea.vmem %s0, %s137
        %s139 = smul.u32 8, %s10
      $region24: #{tpu_custom_call.1} parent=19 // pred_fallthru
        _
    $region20: #{tpu_custom_call.1} parent=5 // pred_fallthru
      _
    %p140 = scmp.le.s32.totalorder 1, %s10
    %p141 = scmp.lt.s32.totalorder %s10, 3
    %p142 = pnand %p140, %p141
    %p143 = pneg %p142
    // Predicated region
    $region25: #{tpu_custom_call.1} parent=5 // pred_check
      _
    $region26: #{tpu_custom_call.1} parent=5 // pred_check_branch
      %145 = sbr.rel (%p142) target = $region28
    $region27: #{tpu_custom_call.1} parent=5 // pred_region
      %s146 = ssub.s32 %s10, 1
      %s147 = smul.u32 8, %s15
      %p148 = scmp.lt.s32.totalorder %s147, 15
      %s149 = scalar_select %p148, %s147, 15
      %s150 = smul.addr %s149, 4
      %s151 = scalar_lea.vmem %s0, %s150
      %p152 = pneg %p36
      %p153 = pneg %p33
      %p154 = pneg %p57
      %p155 = pneg %p54
      %p156 = pneg %p83
      %p157 = pneg %p80
      %s158 = smul.u32 8, %s15
      %p159 = scmp.lt.s32.totalorder %s158, 15
      %s160 = scalar_select %p159, %s158, 15
      %s161 = smul.addr %s160, 4
      %s162 = scalar_lea.vmem %s2, %s161
      %p163 = pneg %p109
      %p164 = pneg %p106
      %s165 = smul.u32 8, %s15
      %p166 = scmp.lt.s32.totalorder %s165, 15
      %s167 = scalar_select %p166, %s165, 15
      %s168 = smul.addr %s167, 8
      %s169 = scalar_lea.vmem %s3, %s168
      %s170 = smul.u32 8, %s15
      %p171 = scmp.lt.s32.totalorder %s170, 15
      %s172 = scalar_select %p171, %s170, 15
      %s173 = smul.addr %s172, 4
      %s174 = scalar_lea.vmem %s0, %s173
      %s175 = smul.u32 8, %s15
      %s176 = smul.u32 8, %s15
      %p177 = scmp.lt.s32.totalorder %s176, 15
      %s178 = scalar_select %p177, %s176, 15
      %s179 = smul.addr %s178, 4
      %s180 = scalar_lea.vmem %s2, %s179
      %s181 = smul.u32 8, %s15
      %s182 = smul.u32 8, %s15
      %p183 = scmp.lt.s32.totalorder %s182, 15
      %s184 = scalar_select %p183, %s182, 15
      %s185 = smul.addr %s184, 8
      %s186 = scalar_lea.vmem %s3, %s185
      %s187 = smul.u32 8, %s15
      %v189 = vld [vmem:[%s174] sm:$0xf]
      %v190 = vld [vmem:[%s174 + $0x4] sm:$0xf]
      %v191 = vld [vmem:[%s174 + $0x8] sm:$0xf]
      %v192 = vld [vmem:[%s174 + $0xc] sm:$0xf]
      %v193 = vld [vmem:[%s174 + $0x10] sm:$0xf]
      %v194 = vld [vmem:[%s174 + $0x14] sm:$0xf]
      %v195 = vld [vmem:[%s174 + $0x18] sm:$0xf]
      %v196 = vld [vmem:[%s174 + $0x1c] sm:$0xf]
      %v197 = vld [vmem:[%s1] sm:$0xf]
      %v198 = vld [vmem:[%s1 + $0x4] sm:$0xf]
      %v199 = vld [vmem:[%s1 + $0x8] sm:$0xf]
      %v200 = vld [vmem:[%s1 + $0xc] sm:$0xf]
      %v209 = vunpack.c.l.b16 %v189
      %v210 = vunpack.c.l.b16 %v190
      %v211 = vunpack.c.l.b16 %v191
      %v212 = vunpack.c.l.b16 %v192
      %v213 = vunpack.c.l.b16 %v193
      %v214 = vunpack.c.l.b16 %v194
      %v215 = vunpack.c.l.b16 %v195
      %v216 = vunpack.c.l.b16 %v196
      %v217 = vpack.c.b16 %v210, %v209
      %v218 = vpack.c.b16 %v212, %v211
      %v219 = vpack.c.b16 %v214, %v213
      %v220 = vpack.c.b16 %v216, %v215
      %v225 = vunpack.c.l.b16 %v197
      %v226 = vunpack.c.l.b16 %v198
      %v227 = vunpack.c.l.b16 %v199
      %v228 = vunpack.c.l.b16 %v200
      %v229 = vpack.c.b16 %v226, %v225
      %v230 = vpack.c.b16 %v228, %v227
      %vm233 = vcmask 261120
      %v235 = vsel %vm233, %v217, 0
      %v238 = vsel %vm233, %v218, 0
      %v241 = vsel %vm233, %v219, 0
      %v244 = vsel %vm233, %v220, 0
      %246 = vmatprep.subr.bf16.mxu0 0
      %247 = vmatpush1.bf16.msra.mxu0 %v229
      %248 = vmatprep.subr.bf16.mxu0 0
      %249 = vmatpush1.bf16.msra.mxu0 %v230
      %250 = vmatprep.subr.bf16.mxu0 0
      %251 = vmatpush1.bf16.msra.mxu0 0
      %252 = vmatprep.subr.bf16.mxu0 0
      %253 = vmatpush1.bf16.msra.mxu0 0
      %254 = vmatprep.subr.bf16.mxu0 0
      %255 = vmatpush1.bf16.msra.mxu0 0
      %256 = vmatprep.subr.bf16.mxu0 0
      %257 = vmatpush1.bf16.msra.mxu0 0
      %258 = vmatprep.subr.bf16.mxu0 0
      %259 = vmatpush1.bf16.msra.mxu0 0
      %260 = vmatprep.subr.bf16.mxu0 0
      %261 = vmatpush1.bf16.msra.mxu0 0
      %262 = vmatprep.subr.bf16.mxu0 0
      %263 = vmatpush1.bf16.msra.mxu0 0
      %264 = vmatprep.subr.bf16.mxu0 0
      %265 = vmatpush1.bf16.msra.mxu0 0
      %266 = vmatprep.subr.bf16.mxu0 0
      %267 = vmatpush1.bf16.msra.mxu0 0
      %268 = vmatprep.subr.bf16.mxu0 0
      %269 = vmatpush1.bf16.msra.mxu0 0
      %270 = vmatprep.subr.bf16.mxu0 0
      %271 = vmatpush1.bf16.msra.mxu0 0
      %272 = vmatprep.subr.bf16.mxu0 0
      %273 = vmatpush1.bf16.msra.mxu0 0
      %274 = vmatprep.subr.bf16.mxu0 0
      %275 = vmatpush1.bf16.msra.mxu0 0
      %276 = vmatprep.subr.bf16.mxu0 0
      %277 = vmatpush1.bf16.msra.mxu0 0
      %278 = vmatprep.mubr.bf16.mxu0 0
      %279 = vmatmul.mubr.bf16.gmra.mrb[0].mxu0 %v235
      %v280 = vpop.f32.mrb[0].mxu0
      %v281 = vadd.f32 0.0, %v280
      %v282 = vpop.f32.mrb[0].mxu0
      %v283 = vpop.f32.mrb[0].mxu0
      %v284 = vadd.f32 0.0, %v283
      %v285 = vpop.f32.mrb[0].mxu0
      %286 = vmatprep.mubr.bf16.mxu0 0
      %287 = vmatmul.mubr.bf16.gmra.mrb[0].mxu0 %v238
      %v288 = vpop.f32.mrb[0].mxu0
      %v289 = vadd.f32 0.0, %v288
      %v290 = vpop.f32.mrb[0].mxu0
      %v291 = vpop.f32.mrb[0].mxu0
      %v292 = vadd.f32 0.0, %v291
      %v293 = vpop.f32.mrb[0].mxu0
      %294 = vmatprep.mubr.bf16.mxu0 0
      %295 = vmatmul.mubr.bf16.gmra.mrb[0].mxu0 %v241
      %v296 = vpop.f32.mrb[0].mxu0
      %v297 = vadd.f32 0.0, %v296
      %v298 = vpop.f32.mrb[0].mxu0
      %v299 = vpop.f32.mrb[0].mxu0
      %v300 = vadd.f32 0.0, %v299
      %v301 = vpop.f32.mrb[0].mxu0
      %302 = vmatprep.mubr.bf16.mxu0 0
      %303 = vmatmul.mubr.bf16.gmra.mrb[0].mxu0 %v244
      %v304 = vpop.f32.mrb[0].mxu0
      %v305 = vadd.f32 0.0, %v304
      %v306 = vpop.f32.mrb[0].mxu0
      %v307 = vpop.f32.mrb[0].mxu0
      %v308 = vadd.f32 0.0, %v307
      %v309 = vpop.f32.mrb[0].mxu0
      %310 = vdwg.mxu0
      %v311 = vpack.c.bf16 %v284, %v281
      %v312 = vpack.c.bf16 %v292, %v289
      %v313 = vpack.c.bf16 %v300, %v297
      %v314 = vpack.c.bf16 %v308, %v305
      %v319 = vunpack.c.l.b16 %v311
      %v320 = vunpack.c.h.b16 %v311
      %v321 = vunpack.c.l.b16 %v312
      %v322 = vunpack.c.h.b16 %v312
      %v323 = vunpack.c.l.b16 %v313
      %v324 = vunpack.c.h.b16 %v313
      %v325 = vunpack.c.l.b16 %v314
      %v326 = vunpack.c.h.b16 %v314
      %v327 = vpack.c.b16 %v319, %v319
      %v328 = vpack.c.b16 %v320, %v320
      %v329 = vpack.c.b16 %v321, %v321
      %v330 = vpack.c.b16 %v322, %v322
      %v331 = vpack.c.b16 %v323, %v323
      %v332 = vpack.c.b16 %v324, %v324
      %v333 = vpack.c.b16 %v325, %v325
      %v334 = vpack.c.b16 %v326, %v326
      %vm343 = vcmask 257024
      %344 = vst.msk [vmem:[%s180] sm:$0xf] %vm343, %v327
      %345 = vst.msk [vmem:[%s180 + $0x4] sm:$0xf] %vm343, %v328
      %346 = vst.msk [vmem:[%s180 + $0x8] sm:$0xf] %vm343, %v329
      %347 = vst.msk [vmem:[%s180 + $0xc] sm:$0xf] %vm343, %v330
      %348 = vst.msk [vmem:[%s180 + $0x10] sm:$0xf] %vm343, %v331
      %349 = vst.msk [vmem:[%s180 + $0x14] sm:$0xf] %vm343, %v332
      %350 = vst.msk [vmem:[%s180 + $0x18] sm:$0xf] %vm343, %v333
      %351 = vst.msk [vmem:[%s180 + $0x1c] sm:$0xf] %vm343, %v334
      %360 = vrot.lane.b32.xlu0 %v281, 96
      %v361 = vpop.permute.xlu0 %360
      %362 = vrot.lane.b32.xlu0 %v284, 96
      %v363 = vpop.permute.xlu0 %362
      %364 = vrot.lane.b32.xlu0 %v289, 96
      %v365 = vpop.permute.xlu0 %364
      %366 = vrot.lane.b32.xlu0 %v292, 96
      %v367 = vpop.permute.xlu0 %366
      %368 = vrot.lane.b32.xlu0 %v297, 96
      %v369 = vpop.permute.xlu0 %368
      %370 = vrot.lane.b32.xlu0 %v300, 96
      %v371 = vpop.permute.xlu0 %370
      %372 = vrot.lane.b32.xlu0 %v305, 96
      %v373 = vpop.permute.xlu0 %372
      %374 = vrot.lane.b32.xlu0 %v308, 96
      %v375 = vpop.permute.xlu0 %374
      %vm384 = vcmask 64512
      %385 = vst.msk [vmem:[%s186] sm:$0xff] %vm384, %v361
      %386 = vst.msk [vmem:[%s186 + $0x8] sm:$0xff] %vm384, %v363
      %387 = vst.msk [vmem:[%s186 + $0x10] sm:$0xff] %vm384, %v365
      %388 = vst.msk [vmem:[%s186 + $0x18] sm:$0xff] %vm384, %v367
      %389 = vst.msk [vmem:[%s186 + $0x20] sm:$0xff] %vm384, %v369
      %390 = vst.msk [vmem:[%s186 + $0x28] sm:$0xff] %vm384, %v371
      %391 = vst.msk [vmem:[%s186 + $0x30] sm:$0xff] %vm384, %v373
      %392 = vst.msk [vmem:[%s186 + $0x38] sm:$0xff] %vm384, %v375
      %s393 = smul.u32 8, %s15
      %p394 = scmp.lt.s32.totalorder %s393, 15
      %s395 = scalar_select %p394, %s393, 15
      %s396 = smul.addr %s395, 4
      %s397 = scalar_lea.vmem %s2, %s396
      %s398 = smul.u32 8, %s15
      %p399 = scmp.lt.s32.totalorder %s398, 15
      %s400 = scalar_select %p399, %s398, 15
      %s401 = smul.addr %s400, 8
      %s402 = scalar_lea.vmem %s3, %s401
      // Predicated region
      $region29: #{tpu_custom_call.1} parent=27 // pred_check
        %p403 = pneg %p80
      $region30: #{tpu_custom_call.1} parent=27 // pred_check_branch
        %405 = sbr.rel (%p403) target = $region32
      $region31: #{tpu_custom_call.1} parent=27 // pred_region
        %s406 = smul.u32 8, %s15
      $region32: #{tpu_custom_call.1} parent=27 // pred_fallthru
        _
      // Predicated region
      $region33: #{tpu_custom_call.1} parent=27 // pred_check
        %p407 = pneg %p106
      $region34: #{tpu_custom_call.1} parent=27 // pred_check_branch
        %409 = sbr.rel (%p407) target = $region36
      $region35: #{tpu_custom_call.1} parent=27 // pred_region
        %s410 = smul.u32 8, %s15
      $region36: #{tpu_custom_call.1} parent=27 // pred_fallthru
        _
    $region28: #{tpu_custom_call.1} parent=5 // pred_fallthru
      _
    %p411 = scmp.le.s32.totalorder 2, %s10
    // Predicated region
    $region37: #{tpu_custom_call.1} parent=5 // pred_check
      %p412 = pneg %p411
    $region38: #{tpu_custom_call.1} parent=5 // pred_check_branch
      %414 = sbr.rel (%p412) target = $region40
    $region39: #{tpu_custom_call.1} parent=5 // pred_region
      %s415 = ssub.s32 %s10, 2
      // Predicated region
      $region41: #{tpu_custom_call.1} parent=39 // pred_check
        %p416 = pneg %p86
      $region42: #{tpu_custom_call.1} parent=39 // pred_check_branch
        %418 = sbr.rel (%p416) target = $region44
      $region43: #{tpu_custom_call.1} parent=39 // pred_region
        %s419 = smul.u32 8, %s16
        %p420 = scmp.lt.s32.totalorder %s419, 15
        %s421 = scalar_select %p420, %s419, 15
        %s422 = smul.addr %s421, 4
        %s423 = scalar_lea.vmem %s2, %s422
      $region44: #{tpu_custom_call.1} parent=39 // pred_fallthru
        _
      // Predicated region
      $region45: #{tpu_custom_call.1} parent=39 // pred_check
        %p424 = pneg %p112
      $region46: #{tpu_custom_call.1} parent=39 // pred_check_branch
        %426 = sbr.rel (%p424) target = $region48
      $region47: #{tpu_custom_call.1} parent=39 // pred_region
        %s427 = smul.u32 8, %s16
        %p428 = scmp.lt.s32.totalorder %s427, 15
        %s429 = scalar_select %p428, %s427, 15
        %s430 = smul.addr %s429, 8
        %s431 = scalar_lea.vmem %s3, %s430
      $region48: #{tpu_custom_call.1} parent=39 // pred_fallthru
        _
    $region40: #{tpu_custom_call.1} parent=5 // pred_fallthru
      _
  $region6: #{tpu_custom_call.1} parent=0 // loop_footer
    %s14 = sadd.s32 1, %s10
  $region7: #{tpu_custom_call.1} parent=0 // loop_footer_branch
    %9 = sbr.rel target = $region3
  $region8: #{tpu_custom_call.1} parent=0 // loop_exit
    _

</llo_original>
